<compile_context>
chip_gen: v7x
topology: tpu7x:2x2x1
jax: 0.10.0
libtpu: 0.0.40
codegen_flags: <defaults>
</compile_context>

<pallas_src>
import functools

import jax
import jax.numpy as jnp
from jax.experimental import pallas as pl
from jax.experimental.pallas import tpu as pltpu


def _round_up(x, m):
    return pl.cdiv(x, m) * m


# ---------------------------------------------------------------------------
# Kernels
# ---------------------------------------------------------------------------

def _mean_full_c_kernel(x_ref, o_ref, *, inv_c):
    # x_ref: (C, TILE) lane-tile of the last frame; o_ref: (1, TILE).
    s = jnp.sum(x_ref[...].astype(jnp.float32), axis=0, keepdims=True)
    o_ref[...] = (s * inv_c).astype(o_ref.dtype)


def _mean_chunked_c_kernel(x_ref, o_ref, acc_ref, *, inv_c, c_total, c_chunk):
    # Channel axis split across grid axis 1 ("arbitrary"); f32 accumulator.
    k = pl.program_id(1)

    @pl.when(k == 0)
    def _():
        acc_ref[...] = jnp.zeros_like(acc_ref)

    chunk = x_ref[...].astype(jnp.float32)          # (c_chunk, TILE)
    if c_total % c_chunk != 0:
        # Last chunk is partial: rows past C come from an out-of-bounds
        # boundary block (undefined data) -> mask them to zero.
        row = jax.lax.broadcasted_iota(jnp.int32, chunk.shape, 0)
        chunk = jnp.where(k * c_chunk + row < c_total, chunk, 0.0)
    acc_ref[...] += jnp.sum(chunk, axis=0, keepdims=True)

    @pl.when(k == pl.num_programs(1) - 1)
    def _():
        o_ref[...] = (acc_ref[...] * inv_c).astype(o_ref.dtype)


# ---------------------------------------------------------------------------
# Wrapper
# ---------------------------------------------------------------------------

def last_img_model(x, *, vmem_budget_bytes=24 * 1024 * 1024,
                   vmem_limit_bytes=32 * 1024 * 1024):
    """x: (T, C, H, W) -> (1, H, W), matching LastImgModel.forward."""
    T, C, H, W = x.shape
    HW = H * W
    dtype = x.dtype
    itemsize = jnp.dtype(dtype).itemsize
    sublane = {4: 8, 2: 16, 1: 32}.get(itemsize, 8)
    c_sub = _round_up(C, sublane)                 # VMEM blocks are sublane-padded
    hw_lanes = _round_up(HW, 128)                 # lane axis rounded up to 128

    # --- tile sizing (count double-buffered input AND output blocks) -------
    # Bytes per lane of the tile: 2 input buffers (sublane-padded C rows)
    # + 2 output buffers (1 row padded to 8 sublanes).
    per_lane_full = 2 * c_sub * itemsize + 2 * 8 * itemsize
    max_tile = (vmem_budget_bytes // per_lane_full) // 128 * 128

    if max_tile >= 128:
        # Full channel extent per block.
        chunked = False
        c_chunk = C
        tile = min(hw_lanes, max_tile)
    else:
        # Very large C: chunk the channel axis and accumulate in VMEM scratch.
        chunked = True
        tile = min(hw_lanes, 512)
        fixed = (2 * 8 * itemsize + 8 * 4) * tile          # out bufs + f32 scratch
        rem = max(0, vmem_budget_bytes - fixed)
        c_chunk = max(sublane,
                      (rem // (2 * itemsize * tile)) // sublane * sublane)
        c_chunk = min(c_chunk, c_sub)

    # Keep >= ~4 spatial tiles so both v7x TensorCores participate and the DMA
    # of tile i+1 pipelines behind the (cheap) reduction of tile i.
    if hw_lanes >= 512:
        tile = min(tile, _round_up(pl.cdiv(hw_lanes, 4), 128))

    n_tiles = pl.cdiv(hw_lanes, tile)
    n_c = pl.cdiv(C, c_chunk)
    inv_c = 1.0 / C

    # --- input plumbing: never copy / pad the full (T, C, HW) tensor -------
    zero_copy = (HW % 128 == 0)
    if zero_copy:
        # Free reshape; the last frame is selected purely in the index_map, so
        # the first T-1 frames are never read from HBM.
        arr = x.reshape(T, C, HW)
        if chunked:
            in_spec = pl.BlockSpec((None, c_chunk, tile),
                                   lambda i, k: (T - 1, k, i))
        else:
            in_spec = pl.BlockSpec((None, c_chunk, tile),
                                   lambda i: (T - 1, 0, i))
    else:
        # Pad only the last frame (C*HW elements), not the whole tensor.
        arr = jnp.pad(x[T - 1].reshape(C, HW), ((0, 0), (0, hw_lanes - HW)))
        if chunked:
            in_spec = pl.BlockSpec((c_chunk, tile), lambda i, k: (k, i))
        else:
            in_spec = pl.BlockSpec((c_chunk, tile), lambda i: (0, i))

    cost = pl.CostEstimate(
        flops=C * HW + HW,                           # channel-sum adds + 1/C mul
        transcendentals=0,
        bytes_accessed=(C + 1) * HW * itemsize,      # read last frame, write mean
    )

    if chunked:
        out = pl.pallas_call(
            functools.partial(_mean_chunked_c_kernel, inv_c=inv_c,
                              c_total=C, c_chunk=c_chunk),
            out_shape=jax.ShapeDtypeStruct((1, hw_lanes), dtype),
            grid=(n_tiles, n_c),
            in_specs=[in_spec],
            out_specs=pl.BlockSpec((1, tile), lambda i, k: (0, i)),
            scratch_shapes=[pltpu.VMEM((1, tile), jnp.float32)],
            compiler_params=pltpu.CompilerParams(
                dimension_semantics=("parallel", "arbitrary"),
                vmem_limit_bytes=vmem_limit_bytes),
            cost_estimate=cost,
        )(arr)
    else:
        out = pl.pallas_call(
            functools.partial(_mean_full_c_kernel, inv_c=inv_c),
            out_shape=jax.ShapeDtypeStruct((1, hw_lanes), dtype),
            grid=(n_tiles,),
            in_specs=[in_spec],
            out_specs=pl.BlockSpec((1, tile), lambda i: (0, i)),
            compiler_params=pltpu.CompilerParams(
                dimension_semantics=("parallel",),
                vmem_limit_bytes=vmem_limit_bytes),
            cost_estimate=cost,
        )(arr)

    if hw_lanes != HW:
        out = out[:, :HW]
    return out.reshape(1, H, W)


if __name__ == "__main__":
    key = jax.random.PRNGKey(0)
    # Small shapes consistent with the forward: T=2 frames, C=4 channels, 16x16 spatial.
    x = jax.random.normal(key, (2, 4, 16, 16), dtype=jnp.float32)

    out = last_img_model(x)
    out = jax.block_until_ready(out)

    # Reference check against plain JAX (mirrors the PyTorch forward exactly).
    ref = jnp.mean(x[-1], axis=0, keepdims=True)
    assert out.shape == (1, 16, 16), out.shape
    assert jnp.allclose(out, ref, atol=1e-5, rtol=1e-5)

    print("KERNEL_OK")
</pallas_src>

<mosaic_0001>
module attributes {stable_mosaic.version = 11 : i64} {
  func.func @_mean_full_c_kernel(%arg0: i32, %arg1: memref<1x4x256xf32, #tpu.memory_space<vmem>>, %arg2: memref<1x256xf32, #tpu.memory_space<vmem>>) attributes {dimension_semantics = [#tpu.dimension_semantics<parallel>], iteration_bounds = array<i64: 1>, scalar_prefetch = 0 : i64, scratch_operands = 0 : i64, tpu.core_type = #tpu.core_type<tc>, window_params = [{transform_indices = @transform_0, window_bounds = array<i64: 1, 4, 256>}, {transform_indices = @transform_1, window_bounds = array<i64: 1, 256>}]} {
    %c0 = arith.constant 0 : index
    %c0_0 = arith.constant 0 : index
    %c0_1 = arith.constant 0 : index
    %0 = vector.load %arg1[%c0, %c0_0, %c0_1] : memref<1x4x256xf32, #tpu.memory_space<vmem>>, vector<1x4x256xf32>
    %1 = vector.shape_cast %0 : vector<1x4x256xf32> to vector<4x256xf32>
    %cst = arith.constant dense<0.000000e+00> : vector<256xf32>
    %2 = vector.multi_reduction <add>, %1, %cst [0] : vector<4x256xf32> to vector<256xf32>
    %3 = vector.shape_cast %2 : vector<256xf32> to vector<1x256xf32>
    %cst_2 = arith.constant 2.500000e-01 : f32
    %4 = vector.broadcast %cst_2 : f32 to vector<1x256xf32>
    %5 = arith.mulf %3, %4 : vector<1x256xf32>
    %c0_3 = arith.constant 0 : index
    %c0_4 = arith.constant 0 : index
    %6 = vector.load %arg2[%c0_3, %c0_4] : memref<1x256xf32, #tpu.memory_space<vmem>>, vector<1x256xf32>
    tpu.vector_store %arg2[%c0_3, %c0_4], %5 {strides = array<i32>} : memref<1x256xf32, #tpu.memory_space<vmem>>, vector<1x256xf32>,
    return
  }
  func.func @transform_0(%arg0: i32) -> (i32, i32, i32) {
    %c1_i32 = arith.constant 1 : i32
    %c0_i32 = arith.constant 0 : i32
    %c0_i32_0 = arith.constant 0 : i32
    return %c1_i32, %c0_i32, %arg0 : i32, i32, i32
  }
  func.func @transform_1(%arg0: i32) -> (i32, i32) {
    %c0_i32 = arith.constant 0 : i32
    %c0_i32_0 = arith.constant 0 : i32
    return %c0_i32, %arg0 : i32, i32
  }
}

</mosaic_0001>

<llo_original>
// kernel: tpu_custom_call.1
$region0: #{tpu_custom_call.1}
  #allocation0 [shape = 'u32[]', space=smem, size = 0x4, offset = 0x4, fixed_abs, tag = 'smem constant byte address 0x4 - core index']
  #allocation1 [shape = 'u32[144,128]{1,0:T(1,128)}', space=vmem, size = 0x12000, scoped, tag = 'internal scratch']
  %s0 = inlined_call_operand.hbm [shape: f32[2,4,256], index: 0, kind: input, shape index: {}]
  %s1 = inlined_call_operand.hbm [shape: f32[1,256], index: 1, kind: output, shape index: {}]
  %s2 = sld [smem:[#allocation0]]
  $region18: #{tpu_custom_call.1} parent=0
    _
  %s4 = ssub.s32 1, %s2
  %s5 = scalar_select 0, %s4, %s2
  $region1: #{tpu_custom_call.1} parent=0
    #allocation2 [shape = 'u8[4096]{0}', space=vmem, size = 0x1000, scoped, tag = 'input window, operand 0, single buffered']
    #allocation3 [shape = 's32[1]{0}', space=sflag, size = 0x4, scoped, tag = 'scoped memory for tpu_custom_call.1']
    #allocation4 [shape = 's32[1]{0}', space=sflag, size = 0x4, scoped, tag = 'scoped memory for tpu_custom_call.1']
    #allocation5 [shape = 'u8[1024]{0}', space=vmem, size = 0x400, scoped, tag = 'output window, operand 0, single buffered']
    %6 = vsyncpa [#allocation3], 0
    %7 = vsyncpa [#allocation4], 0
    // Predicated region
    $region2: #{tpu_custom_call.1} parent=1 // pred_check
      _
    $region3: #{tpu_custom_call.1} parent=1 // pred_check_branch
      %9 = sbr.rel (0) target = $region5
    $region4: #{tpu_custom_call.1} parent=1 // pred_region
      %s11 = ssub.s32 128, 128
      %12 = vsyncadd [#allocation3], %s11
      %s13 = scalar_lea.hbm %s0, 128
      %s15 = sshll.u32 [#allocation2], 4
      %s16 = int_to_ptr.vmem [resolvable:$true] %s15
      %18 = dma.hbm_to_vmem [thread:$0]  %s13, 128, %s16, [#allocation3]
    $region5: #{tpu_custom_call.1} parent=1 // pred_fallthru
      _
    // Predicated region
    $region6: #{tpu_custom_call.1} parent=1 // pred_check
      _
    $region7: #{tpu_custom_call.1} parent=1 // pred_check_branch
      %20 = sbr.rel (0) target = $region9
    $region8: #{tpu_custom_call.1} parent=1 // pred_region
      %21 = dma.done [#allocation3], 128
    $region9: #{tpu_custom_call.1} parent=1 // pred_fallthru
      _
    %v22 = vld [vmem:[#allocation2] sm:$0xff]
    %v24 = vcombine.high %v22, %v22
    %vm26 = vcmask 1043456
    %v27 = vsel %vm26, %v22, 0.0
    %v28 = vrot.slane %v27, 4
    %v29 = vadd.f32 %v27, %v28
    %v30 = vrot.slane %v29, 2
    %v31 = vadd.f32 %v29, %v30
    %v32 = vrot.slane %v31, 1
    %v33 = vadd.f32 %v31, %v32
    %v34 = vsel %vm26, %v24, 0.0
    %v35 = vrot.slane %v34, 4
    %v36 = vadd.f32 %v34, %v35
    %v37 = vrot.slane %v36, 2
    %v38 = vadd.f32 %v36, %v37
    %v39 = vrot.slane %v38, 1
    %v40 = vadd.f32 %v38, %v39
    %v41 = vmul.f32 %v33, 0.25
    %v42 = vmul.f32 %v40, 0.25
    %v45 = vcombine.low %v41, %v42
    %v47 = vunpack.c.l.s4 1966171168
    %v48 = vunpack.c.0.s8 %v47
    %v49 = vlaneseq
    %v50 = vshrl.u32 %v49, 7
    %v51 = vsub.s32 %v48, %v50
    %v52 = vrot.slane %v45, %v51
    %v54 = vunpack.c.l.s4 1966171168
    %v55 = vunpack.c.0.s8 %v54
    %v56 = vlaneseq
    %v57 = vshrl.u32 %v56, 7
    %v58 = vsub.s32 %v55, %v57
    %v59 = vrot.slane %v52, %v58
    %v61 = vlaneseq
    %vm62 = vcmp.ge.s32.totalorder %v61, 0
    %vm63 = vcmp.lt.s32.totalorder %v61, 256
    %vm64 = vmand %vm62, %vm63
    %65 = vst.msk [vmem:[#allocation5] sm:$0x3] %vm64, %v59
    // Predicated region
    $region10: #{tpu_custom_call.1} parent=1 // pred_check
      _
    $region11: #{tpu_custom_call.1} parent=1 // pred_check_branch
      %67 = sbr.rel (0) target = $region13
    $region12: #{tpu_custom_call.1} parent=1 // pred_region
      %s69 = ssub.s32 32, 32
      %70 = vsyncadd [#allocation4], %s69
      %s72 = sshll.u32 [#allocation5], 4
      %s73 = int_to_ptr.vmem [resolvable:$true] %s72
      %75 = dma.vmem_to_hbm [thread:$0]  %s73, 32, %s1, [#allocation4]
    $region13: #{tpu_custom_call.1} parent=1 // pred_fallthru
      _
    // Predicated region
    $region14: #{tpu_custom_call.1} parent=1 // pred_check
      _
    $region15: #{tpu_custom_call.1} parent=1 // pred_check_branch
      %77 = sbr.rel (0) target = $region17
    $region16: #{tpu_custom_call.1} parent=1 // pred_region
      %78 = dma.done [#allocation4], 32
    $region17: #{tpu_custom_call.1} parent=1 // pred_fallthru
      _
    %79 = vsyncpa [#allocation3], 1
    %80 = vsyncpa [#allocation4], 1

</llo_original>
